<compile_context>
chip_gen: v7x
topology: tpu7x:2x2x1
jax: 0.10.0
libtpu: 0.0.40
codegen_flags: <defaults>
</compile_context>

<pallas_src>
import functools

import jax
import jax.numpy as jnp
from jax import lax
from jax.experimental import pallas as pl
from jax.experimental.pallas import tpu as pltpu

_LANE = 128


def _round_up(x, m):
    return (x + m - 1) // m * m


# ----------------------------- Pallas kernels -----------------------------

def _conv_stats_kernel(a_ref, w_ref, y_ref, stats_ref, acc_ref):
    """Conv tile as matmul + BN batch-statistics epilogue.

    a_ref: (tile_m, K) bf16 im2col rows; w_ref: (K, C_pad) bf16;
    y_ref: (tile_m, C_pad) f32 conv output tile;
    stats_ref: (8, C_pad) f32, row0 = sum(y), row1 = sum(y*y) over all rows;
    acc_ref: (8, C_pad) f32 VMEM scratch, persistent across the M grid axis.
    """
    i = pl.program_id(0)

    @pl.when(i == 0)
    def _init():
        acc_ref[...] = jnp.zeros_like(acc_ref)

    y = jnp.dot(a_ref[...], w_ref[...], preferred_element_type=jnp.float32)
    y_ref[...] = y

    # Per-channel reductions are VPU/XLU work that hides under the MXU.
    acc_ref[0:1, :] += jnp.sum(y, axis=0, keepdims=True)
    acc_ref[1:2, :] += jnp.sum(y * y, axis=0, keepdims=True)

    @pl.when(i == pl.num_programs(0) - 1)
    def _finalize():
        stats_ref[...] = acc_ref[...]


def _bn_norm_kernel(stats_ref, g_ref, b_ref, y_ref, o_ref, *, count, eps, act):
    """Finalize BatchNorm batch statistics and normalize one row tile."""
    inv_count = 1.0 / float(count)
    mean = stats_ref[0:1, :] * inv_count
    var = stats_ref[1:2, :] * inv_count - mean * mean   # biased variance (train mode)
    inv = lax.rsqrt(var + eps)
    scale = inv * g_ref[...]
    shift = b_ref[...] - mean * scale
    out = y_ref[...] * scale + shift
    if act == "relu":
        out = jnp.maximum(out, 0.0)
    # act is None -> Identity
    o_ref[...] = out


# ------------------------------- Wrapper -----------------------------------

def conv_norm_layer(x_nchw, weight, gamma, beta, *, stride=1, padding=None,
                    eps=1e-5, act=None, tile_m=512):
    """ConvNormLayer forward. x_nchw: (N, C_in, H, W). weight: (C_out, C_in, KH, KW)."""
    assert act in (None, "relu")
    N, C_in, H, W = x_nchw.shape
    C_out, _, KH, KW = weight.shape
    pad = (KH - 1) // 2 if padding is None else padding

    OH = (H + 2 * pad - KH) // stride + 1
    OW = (W + 2 * pad - KW) // stride + 1
    M = N * OH * OW
    K = KH * KW * C_in

    assert tile_m % 8 == 0
    tile_m = min(tile_m, _round_up(M, 8))
    n_tiles = (M + tile_m - 1) // tile_m
    M_pad = n_tiles * tile_m
    C_pad = _round_up(C_out, _LANE)        # lane-dense output channels

    # --- glue: NCHW -> NHWC (bf16), pad, im2col (built directly in bf16) ---
    x = jnp.transpose(x_nchw, (0, 2, 3, 1)).astype(jnp.bfloat16)   # (N, H, W, C_in)
    x = jnp.pad(x, ((0, 0), (pad, pad), (pad, pad), (0, 0)))
    patches = []
    for kh in range(KH):
        for kw in range(KW):
            patches.append(
                x[:, kh:kh + stride * OH:stride, kw:kw + stride * OW:stride, :])
    x_col = jnp.concatenate(patches, axis=-1).reshape(M, K)        # (M, K) bf16
    x_col = jnp.pad(x_col, ((0, M_pad - M), (0, 0)))               # zero rows -> no effect on stats

    # weight (C_out, C_in, KH, KW) -> (KH, KW, C_in, C_out) -> (K, C_out) -> pad lanes, bf16
    w_mat = jnp.transpose(weight.astype(jnp.float32), (2, 3, 1, 0)).reshape(K, C_out)
    w_mat = jnp.pad(w_mat, ((0, 0), (0, C_pad - C_out))).astype(jnp.bfloat16)

    g2 = jnp.pad(gamma.astype(jnp.float32).reshape(1, C_out), ((0, 0), (0, C_pad - C_out)))
    b2 = jnp.pad(beta.astype(jnp.float32).reshape(1, C_out), ((0, 0), (0, C_pad - C_out)))

    F32, BF16 = 4, 2
    # Explicit scoped-VMEM budgets derived from the double-buffered block footprints.
    k1_vmem = int(min(max(
        2 * (tile_m * K * BF16 + K * C_pad * BF16
             + tile_m * C_pad * F32 + 8 * C_pad * F32)
        + 8 * C_pad * F32 + (2 << 20), 4 << 20), 48 << 20))
    k2_vmem = int(min(max(
        2 * (8 * C_pad * F32 + 2 * C_pad * F32 + 2 * tile_m * C_pad * F32)
        + (2 << 20), 4 << 20), 48 << 20))

    # --- Pallas kernel 1: conv as tiled matmul over M + BN-stat accumulation ---
    y, stats = pl.pallas_call(
        _conv_stats_kernel,
        out_shape=(jax.ShapeDtypeStruct((M_pad, C_pad), jnp.float32),
                   jax.ShapeDtypeStruct((8, C_pad), jnp.float32)),
        grid_spec=pltpu.PrefetchScalarGridSpec(
            num_scalar_prefetch=0,
            grid=(n_tiles,),
            in_specs=[
                pl.BlockSpec((tile_m, K), lambda i: (i, 0)),
                pl.BlockSpec((K, C_pad), lambda i: (0, 0)),
            ],
            out_specs=[
                pl.BlockSpec((tile_m, C_pad), lambda i: (i, 0)),
                pl.BlockSpec((8, C_pad), lambda i: (0, 0)),   # revisited accumulator block
            ],
            scratch_shapes=[pltpu.VMEM((8, C_pad), jnp.float32)],
        ),
        compiler_params=pltpu.CompilerParams(
            dimension_semantics=("arbitrary",),   # stats block revisited across M
            vmem_limit_bytes=k1_vmem),
        cost_estimate=pl.CostEstimate(
            flops=2 * M_pad * K * C_pad,
            transcendentals=0,
            bytes_accessed=(M_pad * K * BF16 + K * C_pad * BF16
                            + M_pad * C_pad * F32 + 8 * C_pad * F32)),
    )(x_col, w_mat)

    # --- Pallas kernel 2: BN finalize + normalize (+activation), tiled & parallel ---
    out = pl.pallas_call(
        functools.partial(_bn_norm_kernel, count=M, eps=eps, act=act),
        out_shape=jax.ShapeDtypeStruct((M_pad, C_pad), jnp.float32),
        grid_spec=pltpu.PrefetchScalarGridSpec(
            num_scalar_prefetch=0,
            grid=(n_tiles,),
            in_specs=[
                pl.BlockSpec((8, C_pad), lambda i: (0, 0)),
                pl.BlockSpec((1, C_pad), lambda i: (0, 0)),
                pl.BlockSpec((1, C_pad), lambda i: (0, 0)),
                pl.BlockSpec((tile_m, C_pad), lambda i: (i, 0)),
            ],
            out_specs=pl.BlockSpec((tile_m, C_pad), lambda i: (i, 0)),
        ),
        compiler_params=pltpu.CompilerParams(
            dimension_semantics=("parallel",),
            vmem_limit_bytes=k2_vmem),
        cost_estimate=pl.CostEstimate(
            flops=4 * M_pad * C_pad,
            transcendentals=C_pad,
            bytes_accessed=2 * M_pad * C_pad * F32),
    )(stats, g2, b2, y)

    # --- glue: (M_pad, C_pad) -> (N, OH, OW, C_out) -> NCHW ---
    out = out[:M, :C_out].reshape(N, OH, OW, C_out)
    return jnp.transpose(out, (0, 3, 1, 2))


# ----------------------------- reference (plain JAX) ------------------------

def _reference(x_nchw, weight, gamma, beta, *, stride=1, padding=1, eps=1e-5):
    y = lax.conv_general_dilated(
        x_nchw.astype(jnp.float32), weight.astype(jnp.float32),
        window_strides=(stride, stride),
        padding=[(padding, padding), (padding, padding)],
        dimension_numbers=("NCHW", "OIHW", "NCHW"),
        precision=lax.Precision.HIGHEST)
    mean = jnp.mean(y, axis=(0, 2, 3), keepdims=True)
    var = jnp.mean((y - mean) ** 2, axis=(0, 2, 3), keepdims=True)
    return (y - mean) * lax.rsqrt(var + eps) * gamma.reshape(1, -1, 1, 1) \
        + beta.reshape(1, -1, 1, 1)


# ----------------------------------- main -----------------------------------

if __name__ == "__main__":
    # ConvNormLayer(ch_in=4, ch_out=8, kernel_size=3, stride=1)  ->  pad=1, bias=False, act=None
    N, C_in, H, W = 2, 4, 16, 16
    C_out, KH, KW = 8, 3, 3

    key = jax.random.PRNGKey(0)
    k_x, k_w, k_g, k_b = jax.random.split(key, 4)

    x = jax.random.normal(k_x, (N, C_in, H, W), dtype=jnp.float32)
    weight = jax.random.normal(k_w, (C_out, C_in, KH, KW), dtype=jnp.float32) * 0.1
    gamma = 1.0 + 0.1 * jax.random.normal(k_g, (C_out,), dtype=jnp.float32)
    beta = 0.1 * jax.random.normal(k_b, (C_out,), dtype=jnp.float32)

    # Small tile so the tiny demo problem (M = 2*16*16 = 512 rows) still exercises the
    # multi-step grid / stats-accumulation path; real layer sizes use the larger default.
    out = conv_norm_layer(x, weight, gamma, beta, stride=1, padding=1, act=None, tile_m=128)
    out = jax.block_until_ready(out)

    ref = _reference(x, weight, gamma, beta, stride=1, padding=1)
    assert out.shape == (N, C_out, H, W)
    # bf16 MXU operands (f32 accumulation) introduce ~0.2-0.4% relative rounding on the
    # conv; compare against the exact f32 reference with a matching tolerance.
    assert jnp.allclose(out, ref, rtol=1e-2, atol=1e-2), "mismatch vs reference"

    print("KERNEL_OK")
</pallas_src>

<mosaic_0001>
module attributes {stable_mosaic.version = 11 : i64} {
  func.func @_conv_stats_kernel(%arg0: i32, %arg1: memref<128x36xbf16, #tpu.memory_space<vmem>>, %arg2: memref<36x128xbf16, #tpu.memory_space<vmem>>, %arg3: memref<128x128xf32, #tpu.memory_space<vmem>>, %arg4: memref<8x128xf32, #tpu.memory_space<vmem>>, %arg5: memref<8x128xf32, #tpu.memory_space<vmem>>) attributes {dimension_semantics = [#tpu.dimension_semantics<arbitrary>], iteration_bounds = array<i64: 4>, scalar_prefetch = 0 : i64, scratch_operands = 1 : i64, tpu.core_type = #tpu.core_type<tc>, window_params = [{transform_indices = @transform_0, window_bounds = array<i64: 128, 36>}, {pipeline_mode = #tpu.pipeline_mode<synchronous>, transform_indices = @transform_1, window_bounds = array<i64: 36, 128>}, {transform_indices = @transform_2, window_bounds = array<i64: 128, 128>}, {pipeline_mode = #tpu.pipeline_mode<synchronous>, transform_indices = @transform_3, window_bounds = array<i64: 8, 128>}]} {
    %c0_i32 = arith.constant 0 : i32
    %0 = arith.cmpi eq, %arg0, %c0_i32 : i32
    %1 = arith.extui %0 : i1 to i32
    %c0_i32_0 = arith.constant 0 : i32
    %2 = arith.cmpi ne, %1, %c0_i32_0 : i32
    scf.if %2 {
      %cst_16 = arith.constant 0.000000e+00 : f32
      %21 = vector.broadcast %cst_16 : f32 to vector<8x128xf32>
      %c0_17 = arith.constant 0 : index
      %c0_18 = arith.constant 0 : index
      %22 = vector.load %arg5[%c0_17, %c0_18] : memref<8x128xf32, #tpu.memory_space<vmem>>, vector<8x128xf32>
      tpu.vector_store %arg5[%c0_17, %c0_18], %21 {strides = array<i32>} : memref<8x128xf32, #tpu.memory_space<vmem>>, vector<8x128xf32>,
    } else {
    }
    %c0 = arith.constant 0 : index
    %c0_1 = arith.constant 0 : index
    %3 = vector.load %arg1[%c0, %c0_1] : memref<128x36xbf16, #tpu.memory_space<vmem>>, vector<128x36xbf16>
    %c0_2 = arith.constant 0 : index
    %c0_3 = arith.constant 0 : index
    %4 = vector.load %arg2[%c0_2, %c0_3] : memref<36x128xbf16, #tpu.memory_space<vmem>>, vector<36x128xbf16>
    %cst = arith.constant dense<0.000000e+00> : vector<128x128xf32>
    %5 = tpu.matmul %3, %4, %cst {dimension_numbers = #tpu.dot_dimension_numbers<[1], [0], [0], [1], [0, 0, 1, 1], [], []>} : vector<128x36xbf16>, vector<36x128xbf16>, vector<128x128xf32> -> vector<128x128xf32>
    %c0_4 = arith.constant 0 : index
    %c0_5 = arith.constant 0 : index
    %6 = vector.load %arg3[%c0_4, %c0_5] : memref<128x128xf32, #tpu.memory_space<vmem>>, vector<128x128xf32>
    tpu.vector_store %arg3[%c0_4, %c0_5], %5 {strides = array<i32>} : memref<128x128xf32, #tpu.memory_space<vmem>>, vector<128x128xf32>,
    %c0_6 = arith.constant 0 : index
    %c0_7 = arith.constant 0 : index
    %7 = vector.load %arg5[%c0_6, %c0_7] : memref<8x128xf32, #tpu.memory_space<vmem>>, vector<1x128xf32>
    %cst_8 = arith.constant dense<0.000000e+00> : vector<128xf32>
    %8 = vector.multi_reduction <add>, %5, %cst_8 [0] : vector<128x128xf32> to vector<128xf32>
    %9 = vector.shape_cast %8 : vector<128xf32> to vector<1x128xf32>
    %10 = arith.addf %7, %9 : vector<1x128xf32>
    %c0_9 = arith.constant 0 : index
    %c0_10 = arith.constant 0 : index
    %11 = vector.load %arg5[%c0_9, %c0_10] : memref<8x128xf32, #tpu.memory_space<vmem>>, vector<1x128xf32>
    tpu.vector_store %arg5[%c0_9, %c0_10], %10 {strides = array<i32>} : memref<8x128xf32, #tpu.memory_space<vmem>>, vector<1x128xf32>,
    %c1 = arith.constant 1 : index
    %c0_11 = arith.constant 0 : index
    %12 = vector.load %arg5[%c1, %c0_11] : memref<8x128xf32, #tpu.memory_space<vmem>>, vector<1x128xf32>
    %13 = arith.mulf %5, %5 : vector<128x128xf32>
    %cst_12 = arith.constant dense<0.000000e+00> : vector<128xf32>
    %14 = vector.multi_reduction <add>, %13, %cst_12 [0] : vector<128x128xf32> to vector<128xf32>
    %15 = vector.shape_cast %14 : vector<128xf32> to vector<1x128xf32>
    %16 = arith.addf %12, %15 : vector<1x128xf32>
    %c1_13 = arith.constant 1 : index
    %c0_14 = arith.constant 0 : index
    %17 = vector.load %arg5[%c1_13, %c0_14] : memref<8x128xf32, #tpu.memory_space<vmem>>, vector<1x128xf32>
    tpu.vector_store %arg5[%c1_13, %c0_14], %16 {strides = array<i32>} : memref<8x128xf32, #tpu.memory_space<vmem>>, vector<1x128xf32>,
    %c3_i32 = arith.constant 3 : i32
    %18 = arith.cmpi eq, %arg0, %c3_i32 : i32
    %19 = arith.extui %18 : i1 to i32
    %c0_i32_15 = arith.constant 0 : i32
    %20 = arith.cmpi ne, %19, %c0_i32_15 : i32
    scf.if %20 {
      %c0_16 = arith.constant 0 : index
      %c0_17 = arith.constant 0 : index
      %21 = vector.load %arg5[%c0_16, %c0_17] : memref<8x128xf32, #tpu.memory_space<vmem>>, vector<8x128xf32>
      %c0_18 = arith.constant 0 : index
      %c0_19 = arith.constant 0 : index
      %22 = vector.load %arg4[%c0_18, %c0_19] : memref<8x128xf32, #tpu.memory_space<vmem>>, vector<8x128xf32>
      tpu.vector_store %arg4[%c0_18, %c0_19], %21 {strides = array<i32>} : memref<8x128xf32, #tpu.memory_space<vmem>>, vector<8x128xf32>,
    } else {
    }
    return
  }
  func.func @transform_0(%arg0: i32) -> (i32, i32) {
    %c0_i32 = arith.constant 0 : i32
    %c0_i32_0 = arith.constant 0 : i32
    return %arg0, %c0_i32 : i32, i32
  }
  func.func @transform_1(%arg0: i32) -> (i32, i32) {
    %c0_i32 = arith.constant 0 : i32
    %c0_i32_0 = arith.constant 0 : i32
    %c0_i32_1 = arith.constant 0 : i32
    return %c0_i32, %c0_i32_0 : i32, i32
  }
  func.func @transform_2(%arg0: i32) -> (i32, i32) {
    %c0_i32 = arith.constant 0 : i32
    %c0_i32_0 = arith.constant 0 : i32
    return %arg0, %c0_i32 : i32, i32
  }
  func.func @transform_3(%arg0: i32) -> (i32, i32) {
    %c0_i32 = arith.constant 0 : i32
    %c0_i32_0 = arith.constant 0 : i32
    %c0_i32_1 = arith.constant 0 : i32
    return %c0_i32, %c0_i32_0 : i32, i32
  }
}

</mosaic_0001>

<llo_original>
// kernel: tpu_custom_call.1
$region0: #{tpu_custom_call.1}
  #allocation0 [shape = 'u32[]', space=smem, size = 0x4, offset = 0x4, fixed_abs, tag = 'smem constant byte address 0x4 - core index']
  #allocation1 [shape = 'u32[144,128]{1,0:T(1,128)}', space=vmem, size = 0x12000, scoped, tag = 'internal scratch']
  #allocation2 [shape = 'f32[8,128]{1,0:T(8,128)}', space=vmem, size = 0x1000, scoped, tag = 'scratch operand']
  %s0 = inlined_call_operand.vmem [shape: bf16[512,36], index: 0, kind: input, shape index: {}]
  %s1 = inlined_call_operand.vmem [shape: bf16[36,128], index: 1, kind: input, shape index: {}]
  %s2 = inlined_call_operand.hbm [shape: f32[512,128], index: 2, kind: output, shape index: {0}]
  %s3 = inlined_call_operand.hbm [shape: f32[8,128], index: 3, kind: output, shape index: {1}]
  %4 = xla_tuple %s2, %s3
  %s5 = sld [smem:[#allocation0]]
  $region57: #{tpu_custom_call.1} parent=0
    _
  %s7 = ssub.s32 1, %s5
  %s8 = scalar_select 0, %s7, %s5
  $region1: #{tpu_custom_call.1} parent=0
    #allocation3 [shape = 'u8[131072]{0}', space=vmem, size = 0x20000, scoped, tag = 'output window, operand 0']
    #allocation4 [shape = 's32[2]{0}', space=sflag, size = 0x8, scoped, tag = 'scoped memory for tpu_custom_call.1']
    #allocation5 [shape = 'u8[4096]{0}', space=vmem, size = 0x1000, scoped, tag = 'output window, operand 1, single buffered']
    #allocation6 [shape = 's32[1]{0}', space=sflag, size = 0x4, scoped, tag = 'scoped memory for tpu_custom_call.1']
    %9 = vsyncpa [#allocation4], 0
    %s10 = scalar_lea.sflag [#allocation4], 1
    %11 = vsyncpa %s10, 0
    %12 = vsyncpa [#allocation6], 0
    loop: start=0, step=1, limit=6
    $region2: #{tpu_custom_call.1} parent=1 // loop_pre_header
      _
    $region3: #{tpu_custom_call.1} parent=1 // loop_header
      %s14 = sphi 0, %s18
      %p15 = scmp.ge.s32.totalorder %s14, 6
      %s24 = sphi 0, %s26
      %s27 = sphi 0, %s24
      %s28 = sphi 0, %s27
      %s44 = sphi 0, %s28
      %s48 = sphi 0, %s48
      %s50 = sphi 0, %s48
      %s51 = sphi 0, %s50
      %s65 = sphi 0, %s51
      %s71 = sphi 0, %s73
      %s74 = sphi 0, %s71
      %s75 = sphi 0, %s74
      %s91 = sphi 0, %s75
      %s95 = sphi 0, %s95
      %s97 = sphi 0, %s95
      %s98 = sphi 0, %s97
      %s112 = sphi 0, %s98
    $region4: #{tpu_custom_call.1} parent=1 // loop_header_branch
      %17 = sbr.rel (%p15) target = $region8
    $region5: #{tpu_custom_call.1} parent=1 // loop_body
      %s19 = ssub.s32 %s14, 1
      %s20 = ssub.s32 %s14, 2
      %s21 = sadd.s32 %s14, 1
      %s22 = ssub.s32 %s14, %s21
      %p23 = scmp.eq.s32.totalorder %s22, 0
      %s25 = sadd.s32 %s24, 1
      %s26 = scalar_select %p23, %s24, %s25
      %p29 = pneg %p23
      %p30 = scmp.eq.s32.totalorder %s14, 3
      %p31 = por %p29, %p30
      %p32 = scmp.ne.s32.totalorder %s24, %s27
      %p33 = scmp.eq.s32.totalorder %s14, 0
      %p34 = por %p32, %p33
      %p35 = scmp.ne.s32.totalorder %s24, %s27
      %p36 = scmp.eq.s32.totalorder %s19, 3
      %p37 = por %p35, %p36
      %p38 = scmp.ne.s32.totalorder %s27, %s28
      %p39 = scmp.eq.s32.totalorder %s19, 0
      %p40 = por %p38, %p39
      %p41 = scmp.ne.s32.totalorder %s27, %s28
      %p42 = scmp.eq.s32.totalorder %s20, 3
      %p43 = por %p41, %p42
      %p45 = scmp.ne.s32.totalorder %s28, %s44
      %p46 = scmp.eq.s32.totalorder %s20, 0
      %p47 = por %p45, %p46
      %s49 = sadd.s32 %s48, 1
      %p52 = scmp.eq.s32.totalorder %s14, 3
      %p53 = scmp.ne.s32.totalorder %s48, %s50
      %p54 = scmp.eq.s32.totalorder %s14, 0
      %p55 = por %p53, %p54
      %p56 = scmp.ne.s32.totalorder %s48, %s50
      %p57 = scmp.eq.s32.totalorder %s19, 3
      %p58 = por %p56, %p57
      %p59 = scmp.ne.s32.totalorder %s50, %s51
      %p60 = scmp.eq.s32.totalorder %s19, 0
      %p61 = por %p59, %p60
      %p62 = scmp.ne.s32.totalorder %s50, %s51
      %p63 = scmp.eq.s32.totalorder %s20, 3
      %p64 = por %p62, %p63
      %p66 = scmp.ne.s32.totalorder %s51, %s65
      %p67 = scmp.eq.s32.totalorder %s20, 0
      %p68 = por %p66, %p67
      %s69 = ssub.s32 %s14, %s21
      %p70 = scmp.eq.s32.totalorder %s69, 0
      %s72 = sadd.s32 %s71, 1
      %s73 = scalar_select %p70, %s71, %s72
      %p76 = pneg %p70
      %p77 = scmp.eq.s32.totalorder %s14, 3
      %p78 = por %p76, %p77
      %p79 = scmp.ne.s32.totalorder %s71, %s74
      %p80 = scmp.eq.s32.totalorder %s14, 0
      %p81 = por %p79, %p80
      %p82 = scmp.ne.s32.totalorder %s71, %s74
      %p83 = scmp.eq.s32.totalorder %s19, 3
      %p84 = por %p82, %p83
      %p85 = scmp.ne.s32.totalorder %s74, %s75
      %p86 = scmp.eq.s32.totalorder %s19, 0
      %p87 = por %p85, %p86
      %p88 = scmp.ne.s32.totalorder %s74, %s75
      %p89 = scmp.eq.s32.totalorder %s20, 3
      %p90 = por %p88, %p89
      %p92 = scmp.ne.s32.totalorder %s75, %s91
      %p93 = scmp.eq.s32.totalorder %s20, 0
      %p94 = por %p92, %p93
      %s96 = sadd.s32 %s95, 1
      %p99 = scmp.eq.s32.totalorder %s14, 3
      %p100 = scmp.ne.s32.totalorder %s95, %s97
      %p101 = scmp.eq.s32.totalorder %s14, 0
      %p102 = por %p100, %p101
      %p103 = scmp.ne.s32.totalorder %s95, %s97
      %p104 = scmp.eq.s32.totalorder %s19, 3
      %p105 = por %p103, %p104
      %p106 = scmp.ne.s32.totalorder %s97, %s98
      %p107 = scmp.eq.s32.totalorder %s19, 0
      %p108 = por %p106, %p107
      %p109 = scmp.ne.s32.totalorder %s97, %s98
      %p110 = scmp.eq.s32.totalorder %s20, 3
      %p111 = por %p109, %p110
      %p113 = scmp.ne.s32.totalorder %s98, %s112
      %p114 = scmp.eq.s32.totalorder %s20, 0
      %p115 = por %p113, %p114
      %p116 = scmp.le.s32.totalorder 1, %s14
      %p117 = scmp.lt.s32.totalorder %s14, 5
      %p118 = pnand %p116, %p117
      %p119 = pneg %p118
      // Predicated region
      $region9: #{tpu_custom_call.1} parent=5 // pred_check
        _
      $region10: #{tpu_custom_call.1} parent=5 // pred_check_branch
        %121 = sbr.rel (%p118) target = $region12
      $region11: #{tpu_custom_call.1} parent=5 // pred_region
        %s122 = ssub.s32 %s14, 1
        // Predicated region
        $region13: #{tpu_custom_call.1} parent=11 // pred_check
          %p123 = pneg %p61
        $region14: #{tpu_custom_call.1} parent=11 // pred_check_branch
          %125 = sbr.rel (%p123) target = $region16
        $region15: #{tpu_custom_call.1} parent=11 // pred_region
          _
        $region16: #{tpu_custom_call.1} parent=11 // pred_fallthru
          _
      $region12: #{tpu_custom_call.1} parent=5 // pred_fallthru
        _
      %p126 = scmp.lt.s32.totalorder %s14, 4
      // Predicated region
      $region17: #{tpu_custom_call.1} parent=5 // pred_check
        %p127 = pneg %p126
      $region18: #{tpu_custom_call.1} parent=5 // pred_check_branch
        %129 = sbr.rel (%p127) target = $region20
      $region19: #{tpu_custom_call.1} parent=5 // pred_region
        // Predicated region
        $region21: #{tpu_custom_call.1} parent=19 // pred_check
          %p130 = pneg %p34
        $region22: #{tpu_custom_call.1} parent=19 // pred_check_branch
          %132 = sbr.rel (%p130) target = $region24
        $region23: #{tpu_custom_call.1} parent=19 // pred_region
          %s133 = smul.u32 16, %s14
          %p134 = scmp.lt.s32.totalorder %s133, 63
          %s135 = scalar_select %p134, %s133, 63
          %s136 = smul.addr %s135, 4
          %s137 = scalar_lea.vmem %s0, %s136
          %s138 = smul.u32 16, %s14
        $region24: #{tpu_custom_call.1} parent=19 // pred_fallthru
          _
      $region20: #{tpu_custom_call.1} parent=5 // pred_fallthru
        _
      %p139 = scmp.le.s32.totalorder 1, %s14
      %p140 = scmp.lt.s32.totalorder %s14, 5
      %p141 = pnand %p139, %p140
      %p142 = pneg %p141
      // Predicated region
      $region25: #{tpu_custom_call.1} parent=5 // pred_check
        _
      $region26: #{tpu_custom_call.1} parent=5 // pred_check_branch
        %144 = sbr.rel (%p141) target = $region28
      $region27: #{tpu_custom_call.1} parent=5 // pred_region
        %s145 = ssub.s32 %s14, 1
        %s146 = smul.u32 16, %s19
        %p147 = scmp.lt.s32.totalorder %s146, 63
        %s148 = scalar_select %p147, %s146, 63
        %s149 = smul.addr %s148, 4
        %s150 = scalar_lea.vmem %s0, %s149
        %p151 = pneg %p40
        %p152 = pneg %p37
        %p153 = pneg %p61
        %p154 = pneg %p58
        %p155 = pneg %p87
        %p156 = pneg %p84
        %s157 = sand.u32 %s74, 1
        %s158 = scalar_lea.sflag [#allocation4], %s157
        %s159 = sand.u32 %s74, 1
        %s160 = smul.addr %s159, 128
        %s161 = scalar_lea.vmem [#allocation3], %s160
        %p162 = pneg %p108
        %p163 = pneg %p105
        %s164 = smul.u32 16, %s19
        %p165 = scmp.lt.s32.totalorder %s164, 63
        %s166 = scalar_select %p165, %s164, 63
        %s167 = smul.addr %s166, 4
        %s168 = scalar_lea.vmem %s0, %s167
        %s169 = smul.u32 16, %s19
        %s170 = smul.u32 16, %s19
        %p172 = scmp.eq.s32.totalorder %s19, 0
        // Predicated region
        $region29: #{tpu_custom_call.1} parent=27 // pred_check
          %p173 = pneg %p172
        $region30: #{tpu_custom_call.1} parent=27 // pred_check_branch
          %175 = sbr.rel (%p173) target = $region32
        $region31: #{tpu_custom_call.1} parent=27 // pred_region
          %176 = vst [vmem:[#allocation2] sm:$0xff] 0.0
        $region32: #{tpu_custom_call.1} parent=27 // pred_fallthru
          _
        %v177 = vld [vmem:[%s168] sm:$0xf]
        %v178 = vld [vmem:[%s168 + $0x4] sm:$0xf]
        %v179 = vld [vmem:[%s168 + $0x8] sm:$0xf]
        %v180 = vld [vmem:[%s168 + $0xc] sm:$0xf]
        %v181 = vld [vmem:[%s168 + $0x10] sm:$0xf]
        %v182 = vld [vmem:[%s168 + $0x14] sm:$0xf]
        %v183 = vld [vmem:[%s168 + $0x18] sm:$0xf]
        %v184 = vld [vmem:[%s168 + $0x1c] sm:$0xf]
        %v185 = vld [vmem:[%s168 + $0x20] sm:$0xf]
        %v186 = vld [vmem:[%s168 + $0x24] sm:$0xf]
        %v187 = vld [vmem:[%s168 + $0x28] sm:$0xf]
        %v188 = vld [vmem:[%s168 + $0x2c] sm:$0xf]
        %v189 = vld [vmem:[%s168 + $0x30] sm:$0xf]
        %v190 = vld [vmem:[%s168 + $0x34] sm:$0xf]
        %v191 = vld [vmem:[%s168 + $0x38] sm:$0xf]
        %v192 = vld [vmem:[%s168 + $0x3c] sm:$0xf]
        %v193 = vld [vmem:[%s1] sm:$0xf]
        %v194 = vld [vmem:[%s1 + $0x4] sm:$0xf]
        %v195 = vld [vmem:[%s1 + $0x8] sm:$0xf]
        %v196 = vld [vmem:[%s1 + $0xc] sm:$0xf]
        %v197 = vld [vmem:[%s1 + $0x10] sm:$0x3]
        %v214 = vunpack.c.l.b16 %v177
        %v215 = vunpack.c.l.b16 %v178
        %v216 = vunpack.c.l.b16 %v179
        %v217 = vunpack.c.l.b16 %v180
        %v218 = vunpack.c.l.b16 %v181
        %v219 = vunpack.c.l.b16 %v182
        %v220 = vunpack.c.l.b16 %v183
        %v221 = vunpack.c.l.b16 %v184
        %v222 = vunpack.c.l.b16 %v185
        %v223 = vunpack.c.l.b16 %v186
        %v224 = vunpack.c.l.b16 %v187
        %v225 = vunpack.c.l.b16 %v188
        %v226 = vunpack.c.l.b16 %v189
        %v227 = vunpack.c.l.b16 %v190
        %v228 = vunpack.c.l.b16 %v191
        %v229 = vunpack.c.l.b16 %v192
        %v230 = vpack.c.b16 %v215, %v214
        %v231 = vpack.c.b16 %v217, %v216
        %v232 = vpack.c.b16 %v219, %v218
        %v233 = vpack.c.b16 %v221, %v220
        %v234 = vpack.c.b16 %v223, %v222
        %v235 = vpack.c.b16 %v225, %v224
        %v236 = vpack.c.b16 %v227, %v226
        %v237 = vpack.c.b16 %v229, %v228
        %v243 = vunpack.c.l.b16 %v193
        %v244 = vunpack.c.l.b16 %v194
        %v245 = vunpack.c.l.b16 %v195
        %v246 = vunpack.c.l.b16 %v196
        %v247 = vunpack.c.l.b16 %v197
        %v248 = vpack.c.b16 %v244, %v243
        %v249 = vpack.c.b16 %v246, %v245
        %v250 = vpack.c.b16 %v247, %v247
        %vm253 = vcmask 293888
        %v255 = vsel %vm253, %v230, 0
        %v258 = vsel %vm253, %v231, 0
        %v261 = vsel %vm253, %v232, 0
        %v264 = vsel %vm253, %v233, 0
        %v267 = vsel %vm253, %v234, 0
        %v270 = vsel %vm253, %v235, 0
        %v273 = vsel %vm253, %v236, 0
        %v276 = vsel %vm253, %v237, 0
        %vm278 = vcmask 1041408
        %v280 = vsel %vm278, %v250, 0
        %282 = vmatprep.subr.bf16.mxu0 0
        %283 = vmatpush1.bf16.msra.mxu0 %v248
        %284 = vmatprep.subr.bf16.mxu0 0
        %285 = vmatpush1.bf16.msra.mxu0 %v249
        %286 = vmatprep.subr.bf16.mxu0 0
        %287 = vmatpush1.bf16.msra.mxu0 %v280
        %288 = vmatprep.subr.bf16.mxu0 0
        %289 = vmatpush1.bf16.msra.mxu0 0
        %290 = vmatprep.subr.bf16.mxu0 0
        %291 = vmatpush1.bf16.msra.mxu0 0
        %292 = vmatprep.subr.bf16.mxu0 0
        %293 = vmatpush1.bf16.msra.mxu0 0
        %294 = vmatprep.subr.bf16.mxu0 0
        %295 = vmatpush1.bf16.msra.mxu0 0
        %296 = vmatprep.subr.bf16.mxu0 0
        %297 = vmatpush1.bf16.msra.mxu0 0
        %298 = vmatprep.subr.bf16.mxu0 0
        %299 = vmatpush1.bf16.msra.mxu0 0
        %300 = vmatprep.subr.bf16.mxu0 0
        %301 = vmatpush1.bf16.msra.mxu0 0
        %302 = vmatprep.subr.bf16.mxu0 0
        %303 = vmatpush1.bf16.msra.mxu0 0
        %304 = vmatprep.subr.bf16.mxu0 0
        %305 = vmatpush1.bf16.msra.mxu0 0
        %306 = vmatprep.subr.bf16.mxu0 0
        %307 = vmatpush1.bf16.msra.mxu0 0
        %308 = vmatprep.subr.bf16.mxu0 0
        %309 = vmatpush1.bf16.msra.mxu0 0
        %310 = vmatprep.subr.bf16.mxu0 0
        %311 = vmatpush1.bf16.msra.mxu0 0
        %312 = vmatprep.subr.bf16.mxu0 0
        %313 = vmatpush1.bf16.msra.mxu0 0
        %314 = vmatprep.mubr.bf16.mxu0 0
        %315 = vmatmul.mubr.bf16.gmra.mrb[0].mxu0 %v255
        %v316 = vpop.f32.mrb[0].mxu0
        %v317 = vadd.f32 0.0, %v316
        %v318 = vpop.f32.mrb[0].mxu0
        %v319 = vpop.f32.mrb[0].mxu0
        %v320 = vadd.f32 0.0, %v319
        %v321 = vpop.f32.mrb[0].mxu0
        %322 = vmatprep.mubr.bf16.mxu0 0
        %323 = vmatmul.mubr.bf16.gmra.mrb[0].mxu0 %v258
        %v324 = vpop.f32.mrb[0].mxu0
        %v325 = vadd.f32 0.0, %v324
        %v326 = vpop.f32.mrb[0].mxu0
        %v327 = vpop.f32.mrb[0].mxu0
        %v328 = vadd.f32 0.0, %v327
        %v329 = vpop.f32.mrb[0].mxu0
        %330 = vmatprep.mubr.bf16.mxu0 0
        %331 = vmatmul.mubr.bf16.gmra.mrb[0].mxu0 %v261
        %v332 = vpop.f32.mrb[0].mxu0
        %v333 = vadd.f32 0.0, %v332
        %v334 = vpop.f32.mrb[0].mxu0
        %v335 = vpop.f32.mrb[0].mxu0
        %v336 = vadd.f32 0.0, %v335
        %v337 = vpop.f32.mrb[0].mxu0
        %338 = vmatprep.mubr.bf16.mxu0 0
        %339 = vmatmul.mubr.bf16.gmra.mrb[0].mxu0 %v264
        %v340 = vpop.f32.mrb[0].mxu0
        %v341 = vadd.f32 0.0, %v340
        %v342 = vpop.f32.mrb[0].mxu0
        %v343 = vpop.f32.mrb[0].mxu0
        %v344 = vadd.f32 0.0, %v343
        %v345 = vpop.f32.mrb[0].mxu0
        %346 = vmatprep.mubr.bf16.mxu0 0
        %347 = vmatmul.mubr.bf16.gmra.mrb[0].mxu0 %v267
        %v348 = vpop.f32.mrb[0].mxu0
        %v349 = vadd.f32 0.0, %v348
        %v350 = vpop.f32.mrb[0].mxu0
        %v351 = vpop.f32.mrb[0].mxu0
        %v352 = vadd.f32 0.0, %v351
        %v353 = vpop.f32.mrb[0].mxu0
        %354 = vmatprep.mubr.bf16.mxu0 0
        %355 = vmatmul.mubr.bf16.gmra.mrb[0].mxu0 %v270
        %v356 = vpop.f32.mrb[0].mxu0
        %v357 = vadd.f32 0.0, %v356
        %v358 = vpop.f32.mrb[0].mxu0
        %v359 = vpop.f32.mrb[0].mxu0
        %v360 = vadd.f32 0.0, %v359
        %v361 = vpop.f32.mrb[0].mxu0
        %362 = vmatprep.mubr.bf16.mxu0 0
        %363 = vmatmul.mubr.bf16.gmra.mrb[0].mxu0 %v273
        %v364 = vpop.f32.mrb[0].mxu0
        %v365 = vadd.f32 0.0, %v364
        %v366 = vpop.f32.mrb[0].mxu0
        %v367 = vpop.f32.mrb[0].mxu0
        %v368 = vadd.f32 0.0, %v367
        %v369 = vpop.f32.mrb[0].mxu0
        %370 = vmatprep.mubr.bf16.mxu0 0
        %371 = vmatmul.mubr.bf16.gmra.mrb[0].mxu0 %v276
        %v372 = vpop.f32.mrb[0].mxu0
        %v373 = vadd.f32 0.0, %v372
        %v374 = vpop.f32.mrb[0].mxu0
        %v375 = vpop.f32.mrb[0].mxu0
        %v376 = vadd.f32 0.0, %v375
        %v377 = vpop.f32.mrb[0].mxu0
        %378 = vdwg.mxu0
        %379 = vst [vmem:[%s161] sm:$0xff] %v317
        %380 = vst [vmem:[%s161 + $0x8] sm:$0xff] %v320
        %381 = vst [vmem:[%s161 + $0x10] sm:$0xff] %v325
        %382 = vst [vmem:[%s161 + $0x18] sm:$0xff] %v328
        %383 = vst [vmem:[%s161 + $0x20] sm:$0xff] %v333
        %384 = vst [vmem:[%s161 + $0x28] sm:$0xff] %v336
        %385 = vst [vmem:[%s161 + $0x30] sm:$0xff] %v341
        %386 = vst [vmem:[%s161 + $0x38] sm:$0xff] %v344
        %387 = vst [vmem:[%s161 + $0x40] sm:$0xff] %v349
        %388 = vst [vmem:[%s161 + $0x48] sm:$0xff] %v352
        %389 = vst [vmem:[%s161 + $0x50] sm:$0xff] %v357
        %390 = vst [vmem:[%s161 + $0x58] sm:$0xff] %v360
        %391 = vst [vmem:[%s161 + $0x60] sm:$0xff] %v365
        %392 = vst [vmem:[%s161 + $0x68] sm:$0xff] %v368
        %393 = vst [vmem:[%s161 + $0x70] sm:$0xff] %v373
        %394 = vst [vmem:[%s161 + $0x78] sm:$0xff] %v376
        %v395 = vld [vmem:[#allocation2] sm:$0x1]
        %v396 = vadd.f32 %v317, %v320
        %v397 = vadd.f32 %v396, %v325
        %v398 = vadd.f32 %v397, %v328
        %v399 = vadd.f32 %v398, %v333
        %v400 = vadd.f32 %v399, %v336
        %v401 = vadd.f32 %v400, %v341
        %v402 = vadd.f32 %v401, %v344
        %v403 = vadd.f32 %v402, %v349
        %v404 = vadd.f32 %v403, %v352
        %v405 = vadd.f32 %v404, %v357
        %v406 = vadd.f32 %v405, %v360
        %v407 = vadd.f32 %v406, %v365
        %v408 = vadd.f32 %v407, %v368
        %v409 = vadd.f32 %v408, %v373
        %v410 = vadd.f32 %v409, %v376
        %v411 = vrot.slane %v410, 4
        %v412 = vadd.f32 %v410, %v411
        %v413 = vrot.slane %v412, 2
        %v414 = vadd.f32 %v412, %v413
        %v415 = vrot.slane %v414, 1
        %v416 = vadd.f32 %v414, %v415
        %v417 = vadd.f32 %v395, %v416
        %418 = vst [vmem:[#allocation2] sm:$0x1] %v417
        %v419 = vld [vmem:[#allocation2 + $0x1] sm:$0x1]
        %v420 = vmul.f32 %v317, %v317
        %v421 = vmul.f32 %v320, %v320
        %v422 = vmul.f32 %v325, %v325
        %v423 = vmul.f32 %v328, %v328
        %v424 = vmul.f32 %v333, %v333
        %v425 = vmul.f32 %v336, %v336
        %v426 = vmul.f32 %v341, %v341
        %v427 = vmul.f32 %v344, %v344
        %v428 = vmul.f32 %v349, %v349
        %v429 = vmul.f32 %v352, %v352
        %v430 = vmul.f32 %v357, %v357
        %v431 = vmul.f32 %v360, %v360
        %v432 = vmul.f32 %v365, %v365
        %v433 = vmul.f32 %v368, %v368
        %v434 = vmul.f32 %v373, %v373
        %v435 = vmul.f32 %v376, %v376
        %v436 = vadd.f32 %v420, %v421
        %v437 = vadd.f32 %v436, %v422
        %v438 = vadd.f32 %v437, %v423
        %v439 = vadd.f32 %v438, %v424
        %v440 = vadd.f32 %v439, %v425
        %v441 = vadd.f32 %v440, %v426
        %v442 = vadd.f32 %v441, %v427
        %v443 = vadd.f32 %v442, %v428
        %v444 = vadd.f32 %v443, %v429
        %v445 = vadd.f32 %v444, %v430
        %v446 = vadd.f32 %v445, %v431
        %v447 = vadd.f32 %v446, %v432
        %v448 = vadd.f32 %v447, %v433
        %v449 = vadd.f32 %v448, %v434
        %v450 = vadd.f32 %v449, %v435
        %v451 = vrot.slane %v450, 4
        %v452 = vadd.f32 %v450, %v451
        %v453 = vrot.slane %v452, 2
        %v454 = vadd.f32 %v452, %v453
        %v455 = vrot.slane %v454, 1
        %v456 = vadd.f32 %v454, %v455
        %v457 = vadd.f32 %v419, %v456
        %458 = vst [vmem:[#allocation2 + $0x1] sm:$0x1] %v457
        %p459 = scmp.eq.s32.totalorder %s19, 3
        // Predicated region
        $region33: #{tpu_custom_call.1} parent=27 // pred_check
          %p460 = pneg %p459
        $region34: #{tpu_custom_call.1} parent=27 // pred_check_branch
          %462 = sbr.rel (%p460) target = $region36
        $region35: #{tpu_custom_call.1} parent=27 // pred_region
          %v463 = vld [vmem:[#allocation2] sm:$0xff]
          %464 = vst [vmem:[#allocation5] sm:$0xff] %v463
        $region36: #{tpu_custom_call.1} parent=27 // pred_fallthru
          _
        %s465 = sand.u32 %s74, 1
        %s466 = scalar_lea.sflag [#allocation4], %s465
        %s467 = sand.u32 %s74, 1
        %s468 = smul.addr %s467, 128
        %s469 = scalar_lea.vmem [#allocation3], %s468
        // Predicated region
        $region37: #{tpu_custom_call.1} parent=27 // pred_check
          %p470 = pneg %p84
        $region38: #{tpu_custom_call.1} parent=27 // pred_check_branch
          %472 = sbr.rel (%p470) target = $region40
        $region39: #{tpu_custom_call.1} parent=27 // pred_region
          %s473 = smul.u32 16, %s19
          %s475 = ssub.s32 2048, 2048
          %476 = vsyncadd %s466, %s475
          %s477 = smul.addr %s473, 128
          %s478 = scalar_lea.hbm %s2, %s477
          %s479 = sshll.u32 %s469, 4
          %s480 = int_to_ptr.vmem [resolvable:$true] %s479
          %485 = dma.vmem_to_hbm [thread:$0]  %s480, 2048, %s478, %s466, 128, 128, 8
        $region40: #{tpu_custom_call.1} parent=27 // pred_fallthru
          _
        // Predicated region
        $region41: #{tpu_custom_call.1} parent=27 // pred_check
          %p486 = pneg %p105
        $region42: #{tpu_custom_call.1} parent=27 // pred_check_branch
          %488 = sbr.rel (%p486) target = $region44
        $region43: #{tpu_custom_call.1} parent=27 // pred_region
          %s490 = ssub.s32 128, 128
          %491 = vsyncadd [#allocation6], %s490
          %s493 = sshll.u32 [#allocation5], 4
          %s494 = int_to_ptr.vmem [resolvable:$true] %s493
          %496 = dma.vmem_to_hbm [thread:$0]  %s494, 128, %s3, [#allocation6]
        $region44: #{tpu_custom_call.1} parent=27 // pred_fallthru
          _
        // Predicated region
        $region45: #{tpu_custom_call.1} parent=27 // pred_check
          %p497 = pneg %p105
        $region46: #{tpu_custom_call.1} parent=27 // pred_check_branch
          %499 = sbr.rel (%p497) target = $region48
        $region47: #{tpu_custom_call.1} parent=27 // pred_region
          %500 = dma.done [#allocation6], 128
        $region48: #{tpu_custom_call.1} parent=27 // pred_fallthru
          _
      $region28: #{tpu_custom_call.1} parent=5 // pred_fallthru
        _
      %p501 = scmp.le.s32.totalorder 2, %s14
      // Predicated region
      $region49: #{tpu_custom_call.1} parent=5 // pred_check
        %p502 = pneg %p501
      $region50: #{tpu_custom_call.1} parent=5 // pred_check_branch
        %504 = sbr.rel (%p502) target = $region52
      $region51: #{tpu_custom_call.1} parent=5 // pred_region
        %s505 = ssub.s32 %s14, 2
        // Predicated region
        $region53: #{tpu_custom_call.1} parent=51 // pred_check
          %p506 = pneg %p90
        $region54: #{tpu_custom_call.1} parent=51 // pred_check_branch
          %508 = sbr.rel (%p506) target = $region56
        $region55: #{tpu_custom_call.1} parent=51 // pred_region
          %s509 = sand.u32 %s75, 1
          %s510 = scalar_lea.sflag [#allocation4], %s509
          %s511 = sand.u32 %s75, 1
          %s512 = smul.addr %s511, 128
          %s513 = scalar_lea.vmem [#allocation3], %s512
          %514 = dma.done %s510, 2048
        $region56: #{tpu_custom_call.1} parent=51 // pred_fallthru
          _
      $region52: #{tpu_custom_call.1} parent=5 // pred_fallthru
        _
    $region6: #{tpu_custom_call.1} parent=1 // loop_footer
      %s18 = sadd.s32 1, %s14
    $region7: #{tpu_custom_call.1} parent=1 // loop_footer_branch
      %13 = sbr.rel target = $region3
    $region8: #{tpu_custom_call.1} parent=1 // loop_exit
      _
    %515 = vsyncpa [#allocation4], 1
    %s516 = scalar_lea.sflag [#allocation4], 1
    %517 = vsyncpa %s516, 1
    %518 = vsyncpa [#allocation6], 1

</llo_original>
